<compile_context>
chip_gen: v7x
topology: tpu7x:2x2x1
jax: 0.10.0
libtpu: 0.0.40
codegen_flags: <defaults>
</compile_context>

<pallas_src>
import jax
import jax.numpy as jnp
from jax import lax
from jax.experimental import pallas as pl
from jax.experimental.pallas import tpu as pltpu

VOCAB = 100          # nn.Embedding(100, hid_dim)
VOCAB_PAD = 128      # pad vocab to a lane-friendly size for the MXU contraction
LANE = 128


def _round_up(x, m):
    return (x + m - 1) // m * m


def prepare_atom_table(table):
    """One-time parameter prep: zero-pad (100, hid) -> (128, round_up(hid, 128)).

    Do this at parameter-creation time (not per forward call).
    """
    vocab, hid = table.shape
    assert vocab == VOCAB
    hid_p = _round_up(hid, LANE)
    out = jnp.zeros((VOCAB_PAD, hid_p), table.dtype)
    out = out.at[:vocab, :hid].set(table)
    return out


def embed_kernel(idx_ref, table_ref, out_ref):
    # idx_ref  : (tile, 1) int32        -- current tile of atom indices
    # table_ref: (128, hid_p) f32       -- full padded embedding table, resident
    # out_ref  : (tile, hid_p) f32      -- lane-dense output tile
    idx = idx_ref[...]                                     # (tile, 1)
    tile = idx.shape[0]
    vocab = table_ref.shape[0]
    col = lax.broadcasted_iota(jnp.int32, (tile, vocab), 1)
    # NOTE: indices outside [0, 128) produce an all-zero row (module invariant
    # is idx < 100, so this never triggers for valid inputs).
    onehot = (col == idx).astype(table_ref.dtype)          # (tile, vocab), exact
    # NOTE(v5e): if bf16 weights are acceptable, preparing the table in bf16
    # keeps this contraction memory-bound on v5e's weaker f32 MXU; the one-hot
    # itself is exact in bf16.  f32 is kept here to match the reference.
    out_ref[...] = jnp.dot(
        onehot, table_ref[...], preferred_element_type=jnp.float32
    ).astype(out_ref.dtype)


def atom_encoder_forward(x_idx, table_p, hid_dim, *, tile=512):
    """Equivalent of `batch.atom = self.encoder(batch.x)`.

    x_idx   : (N,) integer atom ids in [0, 100)
    table_p : (128, hid_p) padded table from prepare_atom_table()
    hid_dim : original hidden size (output is sliced back to this width)
    returns : (N, hid_dim) float32
    """
    N = x_idx.shape[0]
    vocab_p, hid_p = table_p.shape

    # Tile selection: big rows for MXU/pipeline efficiency, but keep the
    # double-buffered output block under ~16 MiB (v7x has only 64 MiB VMEM),
    # and never larger than the (8-rounded) batch.
    bytes_per_row_out = hid_p * 4
    max_tile_rows = max(8, ((16 * 2 ** 20) // (2 * bytes_per_row_out)) // 8 * 8)
    tile = min(tile, max_tile_rows, _round_up(N, 8))
    tile = max(8, (tile // 8) * 8)

    # Ragged tail: pad indices with 0 (a valid id); extra rows are sliced off.
    N_pad = _round_up(N, tile)
    idx = x_idx.astype(jnp.int32)
    if N_pad != N:
        idx = jnp.concatenate([idx, jnp.zeros((N_pad - N,), jnp.int32)])
    idx2d = idx.reshape(N_pad, 1)

    grid = (N_pad // tile,)

    # Explicit scoped-VMEM budget: output double-buffer + index double-buffer
    # (lane-padded) + resident table (double-buffered) + one-hot temporary.
    est_vmem = (
        2 * tile * hid_p * 4
        + 2 * tile * LANE * 4
        + 2 * vocab_p * hid_p * 4
        + 2 * tile * vocab_p * 4
    )
    vmem_limit = int(min(max(2 * est_vmem, 16 * 2 ** 20), 32 * 2 ** 20))

    out_p = pl.pallas_call(
        embed_kernel,
        out_shape=jax.ShapeDtypeStruct((N_pad, hid_p), table_p.dtype),
        grid=grid,
        in_specs=[
            pl.BlockSpec((tile, 1), lambda i: (i, 0)),           # indices tile
            # Full padded table, constant block index -> stays resident.
            # (pipeline_mode=pl.Buffered(1) would reclaim the dead second
            #  buffer on v7x for very large hid; omitted for portability.)
            pl.BlockSpec((vocab_p, hid_p), lambda i: (0, 0)),
        ],
        out_specs=pl.BlockSpec((tile, hid_p), lambda i: (i, 0)),
        compiler_params=pltpu.CompilerParams(
            dimension_semantics=("parallel",),
            vmem_limit_bytes=vmem_limit,
        ),
    )(idx2d, table_p)

    out = out_p
    if N_pad != N:
        out = out[:N]
    if hid_p != hid_dim:
        out = out[:, :hid_dim]
    return out


if __name__ == "__main__":
    key = jax.random.PRNGKey(0)
    k_idx, k_w = jax.random.split(key)

    hid_dim = 32
    num_atoms = 20  # deliberately not a multiple of 8 to exercise the ragged path

    # Deterministic parameter init: nn.Embedding default is N(0, 1).
    table = jax.random.normal(k_w, (VOCAB, hid_dim), dtype=jnp.float32)
    table_p = prepare_atom_table(table)  # one-time prep, hoisted out of forward

    # Synthetic batch.x: atom-type ids in [0, 100).
    x = jax.random.randint(k_idx, (num_atoms,), 0, VOCAB, dtype=jnp.int32)

    atom = atom_encoder_forward(x, table_p, hid_dim, tile=512)
    atom = jax.block_until_ready(atom)

    # Reference check against a plain-JAX embedding lookup.
    ref = jnp.take(table, x, axis=0)
    assert atom.shape == (num_atoms, hid_dim)
    assert jnp.allclose(atom, ref, atol=1e-5), "mismatch vs reference embedding"

    print("KERNEL_OK")
</pallas_src>

<mosaic_0001>
module attributes {stable_mosaic.version = 11 : i64} {
  func.func @embed_kernel(%arg0: i32, %arg1: memref<24x1xi32, #tpu.memory_space<vmem>>, %arg2: memref<128x128xf32, #tpu.memory_space<vmem>>, %arg3: memref<24x128xf32, #tpu.memory_space<vmem>>) attributes {dimension_semantics = [#tpu.dimension_semantics<parallel>], iteration_bounds = array<i64: 1>, scalar_prefetch = 0 : i64, scratch_operands = 0 : i64, tpu.core_type = #tpu.core_type<tc>, window_params = [{transform_indices = @transform_0, window_bounds = array<i64: 24, 1>}, {pipeline_mode = #tpu.pipeline_mode<synchronous>, transform_indices = @transform_1, window_bounds = array<i64: 128, 128>}, {transform_indices = @transform_2, window_bounds = array<i64: 24, 128>}]} {
    %c0 = arith.constant 0 : index
    %c0_0 = arith.constant 0 : index
    %0 = vector.load %arg1[%c0, %c0_0] : memref<24x1xi32, #tpu.memory_space<vmem>>, vector<24x1xi32>
    %1 = tpu.iota {dimensions = array<i32: 1>} : vector<24x128xi32>
    %2 = vector.broadcast %0 : vector<24x1xi32> to vector<24x128xi32>
    %3 = arith.cmpi eq, %1, %2 : vector<24x128xi32>
    %4 = arith.extui %3 : vector<24x128xi1> to vector<24x128xi32>
    %5 = arith.sitofp %4 : vector<24x128xi32> to vector<24x128xf32>
    %c0_1 = arith.constant 0 : index
    %c0_2 = arith.constant 0 : index
    %6 = vector.load %arg2[%c0_1, %c0_2] : memref<128x128xf32, #tpu.memory_space<vmem>>, vector<128x128xf32>
    %cst = arith.constant dense<0.000000e+00> : vector<24x128xf32>
    %7 = tpu.matmul %5, %6, %cst {dimension_numbers = #tpu.dot_dimension_numbers<[1], [0], [0], [1], [0, 0, 1, 1], [], []>} : vector<24x128xf32>, vector<128x128xf32>, vector<24x128xf32> -> vector<24x128xf32>
    %c0_3 = arith.constant 0 : index
    %c0_4 = arith.constant 0 : index
    %8 = vector.load %arg3[%c0_3, %c0_4] : memref<24x128xf32, #tpu.memory_space<vmem>>, vector<24x128xf32>
    tpu.vector_store %arg3[%c0_3, %c0_4], %7 {strides = array<i32>} : memref<24x128xf32, #tpu.memory_space<vmem>>, vector<24x128xf32>,
    return
  }
  func.func @transform_0(%arg0: i32) -> (i32, i32) {
    %c0_i32 = arith.constant 0 : i32
    %c0_i32_0 = arith.constant 0 : i32
    return %arg0, %c0_i32 : i32, i32
  }
  func.func @transform_1(%arg0: i32) -> (i32, i32) {
    %c0_i32 = arith.constant 0 : i32
    %c0_i32_0 = arith.constant 0 : i32
    %c0_i32_1 = arith.constant 0 : i32
    return %c0_i32, %c0_i32_0 : i32, i32
  }
  func.func @transform_2(%arg0: i32) -> (i32, i32) {
    %c0_i32 = arith.constant 0 : i32
    %c0_i32_0 = arith.constant 0 : i32
    return %arg0, %c0_i32 : i32, i32
  }
}

</mosaic_0001>

<llo_original>
// kernel: tpu_custom_call.1
$region0: #{tpu_custom_call.1}
  #allocation0 [shape = 'u32[]', space=smem, size = 0x4, offset = 0x4, fixed_abs, tag = 'smem constant byte address 0x4 - core index']
  #allocation1 [shape = 'u32[144,128]{1,0:T(1,128)}', space=vmem, size = 0x12000, scoped, tag = 'internal scratch']
  %s0 = inlined_call_operand.vmem [shape: s32[24,1], index: 0, kind: input, shape index: {}]
  %s1 = inlined_call_operand.hbm [shape: f32[128,128], index: 1, kind: input, shape index: {}]
  %s2 = inlined_call_operand.hbm [shape: f32[24,128], index: 2, kind: output, shape index: {}]
  %s3 = sld [smem:[#allocation0]]
  $region22: #{tpu_custom_call.1} parent=0
    _
  %s5 = ssub.s32 1, %s3
  %s6 = scalar_select 0, %s5, %s3
  $region1: #{tpu_custom_call.1} parent=0
    #allocation2 [shape = 'u8[65536]{0}', space=vmem, size = 0x10000, scoped, tag = 'input window, operand 1, single buffered']
    #allocation3 [shape = 's32[1]{0}', space=sflag, size = 0x4, scoped, tag = 'scoped memory for tpu_custom_call.1']
    #allocation4 [shape = 's32[1]{0}', space=sflag, size = 0x4, scoped, tag = 'scoped memory for tpu_custom_call.1']
    #allocation5 [shape = 'u8[12288]{0}', space=vmem, size = 0x3000, scoped, tag = 'output window, operand 0, single buffered']
    %7 = vsyncpa [#allocation3], 0
    %8 = vsyncpa [#allocation4], 0
    // Predicated region
    $region2: #{tpu_custom_call.1} parent=1 // pred_check
      _
    $region3: #{tpu_custom_call.1} parent=1 // pred_check_branch
      %10 = sbr.rel (0) target = $region5
    $region4: #{tpu_custom_call.1} parent=1 // pred_region
      _
    $region5: #{tpu_custom_call.1} parent=1 // pred_fallthru
      _
    // Predicated region
    $region6: #{tpu_custom_call.1} parent=1 // pred_check
      _
    $region7: #{tpu_custom_call.1} parent=1 // pred_check_branch
      %12 = sbr.rel (0) target = $region9
    $region8: #{tpu_custom_call.1} parent=1 // pred_region
      %s14 = ssub.s32 2048, 2048
      %15 = vsyncadd [#allocation3], %s14
      %s16 = sshll.u32 [#allocation2], 4
      %s17 = int_to_ptr.vmem [resolvable:$true] %s16
      %22 = dma.hbm_to_vmem [thread:$0]  %s1, 2048, %s17, [#allocation3], 128, 128, 8
    $region9: #{tpu_custom_call.1} parent=1 // pred_fallthru
      _
    // Predicated region
    $region10: #{tpu_custom_call.1} parent=1 // pred_check
      _
    $region11: #{tpu_custom_call.1} parent=1 // pred_check_branch
      %24 = sbr.rel (0) target = $region13
    $region12: #{tpu_custom_call.1} parent=1 // pred_region
      %25 = dma.done [#allocation3], 2048
    $region13: #{tpu_custom_call.1} parent=1 // pred_fallthru
      _
    %v26 = vld [vmem:[%s0] sm:$0xff]
    %v27 = vld [vmem:[%s0 + $0x8] sm:$0xff]
    %v28 = vld [vmem:[%s0 + $0x10] sm:$0xff]
    %v29 = vlaneseq
    %v30 = vand.u32 %v29, 127
    %31 = vset.pattern.permute.xlu0 0
    %32 = vperm.xlu0 %31, %v26
    %v33 = vpop.permute.xlu0 %32
    %34 = vset.pattern.permute.xlu0 0
    %35 = vperm.xlu0 %34, %v27
    %v36 = vpop.permute.xlu0 %35
    %37 = vset.pattern.permute.xlu0 0
    %38 = vperm.xlu0 %37, %v28
    %v39 = vpop.permute.xlu0 %38
    %vm40 = vcmp.eq.s32.totalorder %v30, %v33
    %vm41 = vcmp.eq.s32.totalorder %v30, %v36
    %vm42 = vcmp.eq.s32.totalorder %v30, %v39
    %v43 = vsel %vm40, 1, 0
    %v44 = vsel %vm41, 1, 0
    %v45 = vsel %vm42, 1, 0
    %v46 = vcvt.s32.f32 %v43
    %v47 = vcvt.s32.f32 %v44
    %v48 = vcvt.s32.f32 %v45
    %v49 = vld [vmem:[#allocation2] sm:$0xff]
    %v50 = vld [vmem:[#allocation2 + $0x8] sm:$0xff]
    %v51 = vld [vmem:[#allocation2 + $0x10] sm:$0xff]
    %v52 = vld [vmem:[#allocation2 + $0x18] sm:$0xff]
    %v53 = vld [vmem:[#allocation2 + $0x20] sm:$0xff]
    %v54 = vld [vmem:[#allocation2 + $0x28] sm:$0xff]
    %v55 = vld [vmem:[#allocation2 + $0x30] sm:$0xff]
    %v56 = vld [vmem:[#allocation2 + $0x38] sm:$0xff]
    %v57 = vld [vmem:[#allocation2 + $0x40] sm:$0xff]
    %v58 = vld [vmem:[#allocation2 + $0x48] sm:$0xff]
    %v59 = vld [vmem:[#allocation2 + $0x50] sm:$0xff]
    %v60 = vld [vmem:[#allocation2 + $0x58] sm:$0xff]
    %v61 = vld [vmem:[#allocation2 + $0x60] sm:$0xff]
    %v62 = vld [vmem:[#allocation2 + $0x68] sm:$0xff]
    %v63 = vld [vmem:[#allocation2 + $0x70] sm:$0xff]
    %v64 = vld [vmem:[#allocation2 + $0x78] sm:$0xff]
    %65 = vmatprep.subr.mxu0 0.0
    %66 = vmatpush1.msra.mxu0 %v49
    %67 = vmatprep.subr.mxu0 0.0
    %68 = vmatpush1.msra.mxu0 %v50
    %69 = vmatprep.subr.mxu0 0.0
    %70 = vmatpush1.msra.mxu0 %v51
    %71 = vmatprep.subr.mxu0 0.0
    %72 = vmatpush1.msra.mxu0 %v52
    %73 = vmatprep.subr.mxu0 0.0
    %74 = vmatpush1.msra.mxu0 %v53
    %75 = vmatprep.subr.mxu0 0.0
    %76 = vmatpush1.msra.mxu0 %v54
    %77 = vmatprep.subr.mxu0 0.0
    %78 = vmatpush1.msra.mxu0 %v55
    %79 = vmatprep.subr.mxu0 0.0
    %80 = vmatpush1.msra.mxu0 %v56
    %81 = vmatprep.subr.mxu0 0.0
    %82 = vmatpush1.msra.mxu0 %v57
    %83 = vmatprep.subr.mxu0 0.0
    %84 = vmatpush1.msra.mxu0 %v58
    %85 = vmatprep.subr.mxu0 0.0
    %86 = vmatpush1.msra.mxu0 %v59
    %87 = vmatprep.subr.mxu0 0.0
    %88 = vmatpush1.msra.mxu0 %v60
    %89 = vmatprep.subr.mxu0 0.0
    %90 = vmatpush1.msra.mxu0 %v61
    %91 = vmatprep.subr.mxu0 0.0
    %92 = vmatpush1.msra.mxu0 %v62
    %93 = vmatprep.subr.mxu0 0.0
    %94 = vmatpush1.msra.mxu0 %v63
    %95 = vmatprep.subr.mxu0 0.0
    %96 = vmatpush1.msra.mxu0 %v64
    %97 = vmatprep.subr.mxu0 0.0
    %98 = vmatpush1.msra.mxu0 0.0
    %99 = vmatprep.subr.mxu0 0.0
    %100 = vmatpush1.msra.mxu0 0.0
    %101 = vmatprep.subr.mxu0 0.0
    %102 = vmatpush1.msra.mxu0 0.0
    %103 = vmatprep.subr.mxu0 0.0
    %104 = vmatpush1.msra.mxu0 0.0
    %105 = vmatprep.subr.mxu0 0.0
    %106 = vmatpush1.msra.mxu0 0.0
    %107 = vmatprep.subr.mxu0 0.0
    %108 = vmatpush1.msra.mxu0 0.0
    %109 = vmatprep.subr.mxu0 0.0
    %110 = vmatpush1.msra.mxu0 0.0
    %111 = vmatprep.subr.mxu0 0.0
    %112 = vmatpush1.msra.mxu0 0.0
    %113 = vmatprep.subr.mxu0 0.0
    %114 = vmatpush1.msra.mxu0 0.0
    %115 = vmatprep.subr.mxu0 0.0
    %116 = vmatpush1.msra.mxu0 0.0
    %117 = vmatprep.subr.mxu0 0.0
    %118 = vmatpush1.msra.mxu0 0.0
    %119 = vmatprep.subr.mxu0 0.0
    %120 = vmatpush1.msra.mxu0 0.0
    %121 = vmatprep.subr.mxu0 0.0
    %122 = vmatpush1.msra.mxu0 0.0
    %123 = vmatprep.subr.mxu0 0.0
    %124 = vmatpush1.msra.mxu0 0.0
    %125 = vmatprep.subr.mxu0 0.0
    %126 = vmatpush1.msra.mxu0 0.0
    %127 = vmatprep.subr.mxu0 0.0
    %128 = vmatpush1.msra.mxu0 0.0
    %129 = vmatprep.mubr.f32.mxu0 0.0
    %130 = vmatmul.mubr.f32.gmra.mrb[0].mxu0 %v46
    %v131 = vpop.f32.mrb[0].mxu0
    %v132 = vadd.f32 0.0, %v131
    %v133 = vpop.f32.mrb[0].mxu0
    %134 = vmatprep.mubr.f32.mxu0 0.0
    %135 = vmatmul.mubr.f32.gmra.mrb[0].mxu0 %v47
    %v136 = vpop.f32.mrb[0].mxu0
    %v137 = vadd.f32 0.0, %v136
    %v138 = vpop.f32.mrb[0].mxu0
    %139 = vmatprep.mubr.f32.mxu0 0.0
    %140 = vmatmul.mubr.f32.gmra.mrb[0].mxu0 %v48
    %v141 = vpop.f32.mrb[0].mxu0
    %v142 = vadd.f32 0.0, %v141
    %v143 = vpop.f32.mrb[0].mxu0
    %144 = vdwg.mxu0
    %145 = vst [vmem:[#allocation5] sm:$0xff] %v132
    %146 = vst [vmem:[#allocation5 + $0x8] sm:$0xff] %v137
    %147 = vst [vmem:[#allocation5 + $0x10] sm:$0xff] %v142
    // Predicated region
    $region14: #{tpu_custom_call.1} parent=1 // pred_check
      _
    $region15: #{tpu_custom_call.1} parent=1 // pred_check_branch
      %149 = sbr.rel (0) target = $region17
    $region16: #{tpu_custom_call.1} parent=1 // pred_region
      %s151 = ssub.s32 384, 384
      %152 = vsyncadd [#allocation4], %s151
      %s153 = sshll.u32 [#allocation5], 4
      %s154 = int_to_ptr.vmem [resolvable:$true] %s153
      %159 = dma.vmem_to_hbm [thread:$0]  %s154, 384, %s2, [#allocation4], 128, 128, 8
    $region17: #{tpu_custom_call.1} parent=1 // pred_fallthru
      _
    // Predicated region
    $region18: #{tpu_custom_call.1} parent=1 // pred_check
      _
    $region19: #{tpu_custom_call.1} parent=1 // pred_check_branch
      %161 = sbr.rel (0) target = $region21
    $region20: #{tpu_custom_call.1} parent=1 // pred_region
      %162 = dma.done [#allocation4], 384
    $region21: #{tpu_custom_call.1} parent=1 // pred_fallthru
      _
    %163 = vsyncpa [#allocation3], 1
    %164 = vsyncpa [#allocation4], 1

</llo_original>
